<compile_context>
chip_gen: v7x
topology: tpu7x:2x2x1
jax: 0.10.0
libtpu: 0.0.40
codegen_flags: <defaults>
</compile_context>

<pallas_src>
import jax
import jax.numpy as jnp
from jax.experimental import pallas as pl
from jax.experimental.pallas import tpu as pltpu

LANES = 1024                         # lane-dense last dim, multiple of 128
VMEM_TILE_BUDGET = 5 * 1024 * 1024   # bytes of (input + output) per pipeline stage


def _binary_kernel(x_ref, o_ref):
    # Elementwise hot path: compare against 0 in the native dtype, emit bool.
    zero = jnp.zeros((), dtype=x_ref.dtype)
    o_ref[...] = x_ref[...] != zero


def binary(x: jax.Array) -> jax.Array:
    """Pallas equivalent of Binary.forward: (x != 0).bool()."""
    orig_shape = x.shape
    total = int(x.size)

    # Degenerate case: nothing to do, avoid zero-extent BlockSpecs.
    if total == 0:
        return jnp.zeros(orig_shape, dtype=jnp.bool_)

    # Flatten to a lane-dense 2D slab; pad the tail only if needed.
    flat = x.reshape(-1)
    padded_total = ((total + LANES - 1) // LANES) * LANES
    needs_pad = padded_total != total
    if needs_pad:
        flat = jnp.pad(flat, (0, padded_total - total))
    rows = padded_total // LANES
    x2d = flat.reshape(rows, LANES)

    # Dtype-adaptive row tile: keep (input + bool output) per stage under the
    # VMEM budget, rounded to a multiple of 8 sublanes.  If the slab is
    # shorter than a tile we take the full extent (always a legal block).
    itemsize = jnp.dtype(x.dtype).itemsize
    target_rows = VMEM_TILE_BUDGET // (LANES * (itemsize + 1))
    target_rows = max(8, (target_rows // 8) * 8)
    tile_rows = min(target_rows, rows)
    grid_rows = pl.cdiv(rows, tile_rows)

    out2d = pl.pallas_call(
        _binary_kernel,
        out_shape=jax.ShapeDtypeStruct((rows, LANES), jnp.bool_),
        grid=(grid_rows,),
        in_specs=[pl.BlockSpec((tile_rows, LANES), lambda i: (i, 0))],
        out_specs=pl.BlockSpec((tile_rows, LANES), lambda i: (i, 0)),
        compiler_params=pltpu.CompilerParams(
            dimension_semantics=("parallel",),
        ),
        cost_estimate=pl.CostEstimate(
            flops=total,
            transcendentals=0,
            bytes_accessed=total * itemsize + total,  # input + bool output
        ),
    )(x2d)

    out_flat = out2d.reshape(-1)
    if needs_pad:
        out_flat = out_flat[:total]
    return out_flat.reshape(orig_shape)


if __name__ == "__main__":
    key = jax.random.PRNGKey(0)

    # Small NCHW input consistent with a typical masking monad usage.
    x = jax.random.normal(key, (2, 4, 16, 16), dtype=jnp.float32)
    # Inject exact zeros so both branches of the mask are exercised.
    zero_mask = jax.random.bernoulli(jax.random.PRNGKey(1), 0.3, x.shape)
    x = jnp.where(zero_mask, 0.0, x)

    out = jax.block_until_ready(binary(x))
    ref = (x != 0.0)
    assert out.dtype == jnp.bool_
    assert out.shape == x.shape
    assert bool(jnp.all(out == ref))

    # Ragged / non-lane-multiple size + bf16 dtype path.
    y = jax.random.normal(jax.random.PRNGKey(2), (3, 5, 7, 13), dtype=jnp.bfloat16)
    y = jnp.where(jax.random.bernoulli(jax.random.PRNGKey(3), 0.3, y.shape), 0.0, y)
    out_y = jax.block_until_ready(binary(y))
    ref_y = (y != 0)
    assert out_y.dtype == jnp.bool_
    assert out_y.shape == y.shape
    assert bool(jnp.all(out_y == ref_y))

    # Larger multi-tile (grid > 1) int32 path to exercise the pipelined grid.
    z = jax.random.randint(jax.random.PRNGKey(4), (8, 64, 64, 32), -2, 3,
                           dtype=jnp.int32)
    out_z = jax.block_until_ready(binary(z))
    ref_z = (z != 0)
    assert out_z.dtype == jnp.bool_
    assert out_z.shape == z.shape
    assert bool(jnp.all(out_z == ref_z))

    print("KERNEL_OK")
</pallas_src>

<mosaic_0001>
module attributes {stable_mosaic.version = 11 : i64} {
  func.func @_binary_kernel(%arg0: i32, %arg1: memref<2x1024xf32, #tpu.memory_space<vmem>>, %arg2: memref<2x1024xi32, #tpu.memory_space<vmem>>) attributes {dimension_semantics = [#tpu.dimension_semantics<parallel>], iteration_bounds = array<i64: 1>, scalar_prefetch = 0 : i64, scratch_operands = 0 : i64, tpu.core_type = #tpu.core_type<tc>, window_params = [{transform_indices = @transform_0, window_bounds = array<i64: 2, 1024>}, {transform_indices = @transform_1, window_bounds = array<i64: 2, 1024>}]} {
    %c0 = arith.constant 0 : index
    %c0_0 = arith.constant 0 : index
    %0 = vector.load %arg1[%c0, %c0_0] : memref<2x1024xf32, #tpu.memory_space<vmem>>, vector<2x1024xf32>
    %cst = arith.constant 0.000000e+00 : f32
    %1 = vector.broadcast %cst : f32 to vector<2x1024xf32>
    %2 = arith.cmpf one, %0, %1 : vector<2x1024xf32>
    %c0_1 = arith.constant 0 : index
    %c0_2 = arith.constant 0 : index
    %3 = vector.load %arg2[%c0_1, %c0_2] : memref<2x1024xi32, #tpu.memory_space<vmem>>, vector<2x1024xi32>
    %4 = arith.extui %2 : vector<2x1024xi1> to vector<2x1024xi32>
    %cst_3 = arith.constant dense<0> : vector<2x1024xi32>
    %5 = arith.cmpi ne, %3, %cst_3 : vector<2x1024xi32>
    tpu.vector_store %arg2[%c0_1, %c0_2], %4 {strides = array<i32>} : memref<2x1024xi32, #tpu.memory_space<vmem>>, vector<2x1024xi32>,
    return
  }
  func.func @transform_0(%arg0: i32) -> (i32, i32) {
    %c0_i32 = arith.constant 0 : i32
    %c0_i32_0 = arith.constant 0 : i32
    return %arg0, %c0_i32 : i32, i32
  }
  func.func @transform_1(%arg0: i32) -> (i32, i32) {
    %c0_i32 = arith.constant 0 : i32
    %c0_i32_0 = arith.constant 0 : i32
    return %arg0, %c0_i32 : i32, i32
  }
}

</mosaic_0001>

<llo_original>
// kernel: tpu_custom_call.1
$region0: #{tpu_custom_call.1}
  #allocation0 [shape = 'u32[]', space=smem, size = 0x4, offset = 0x4, fixed_abs, tag = 'smem constant byte address 0x4 - core index']
  #allocation1 [shape = 'u32[144,128]{1,0:T(1,128)}', space=vmem, size = 0x12000, scoped, tag = 'internal scratch']
  %s0 = inlined_call_operand.hbm [shape: f32[2,1024], index: 0, kind: input, shape index: {}]
  %s1 = inlined_call_operand.vmem [shape: s32[2,1024], index: 1, kind: output, shape index: {}]
  %s2 = sld [smem:[#allocation0]]
  $region18: #{tpu_custom_call.1} parent=0
    _
  %s4 = ssub.s32 1, %s2
  %s5 = scalar_select 0, %s4, %s2
  $region1: #{tpu_custom_call.1} parent=0
    #allocation2 [shape = 'u8[8192]{0}', space=vmem, size = 0x2000, scoped, tag = 'input window, operand 0, single buffered']
    #allocation3 [shape = 's32[1]{0}', space=sflag, size = 0x4, scoped, tag = 'scoped memory for tpu_custom_call.1']
    %6 = vsyncpa [#allocation3], 0
    // Predicated region
    $region2: #{tpu_custom_call.1} parent=1 // pred_check
      _
    $region3: #{tpu_custom_call.1} parent=1 // pred_check_branch
      %8 = sbr.rel (0) target = $region5
    $region4: #{tpu_custom_call.1} parent=1 // pred_region
      %s10 = ssub.s32 256, 256
      %11 = vsyncadd [#allocation3], %s10
      %s13 = sshll.u32 [#allocation2], 4
      %s14 = int_to_ptr.vmem [resolvable:$true] %s13
      %16 = dma.hbm_to_vmem [thread:$0]  %s0, 256, %s14, [#allocation3]
    $region5: #{tpu_custom_call.1} parent=1 // pred_fallthru
      _
    // Predicated region
    $region6: #{tpu_custom_call.1} parent=1 // pred_check
      _
    $region7: #{tpu_custom_call.1} parent=1 // pred_check_branch
      %18 = sbr.rel (0) target = $region9
    $region8: #{tpu_custom_call.1} parent=1 // pred_region
      %19 = dma.done [#allocation3], 256
    $region9: #{tpu_custom_call.1} parent=1 // pred_fallthru
      _
    %v20 = vld [vmem:[#allocation2] sm:$0xff]
    %v21 = vld [vmem:[#allocation2 + $0x8] sm:$0xff]
    %vm22 = vcmp.ne.f32.partialorder %v20, 0.0
    %vm23 = vcmp.ne.f32.partialorder %v21, 0.0
    %v24 = vsel %vm22, 1, 0
    %v25 = vsel %vm23, 1, 0
    %26 = vst [vmem:[%s1] sm:$0xff] %v24
    %27 = vst [vmem:[%s1 + $0x8] sm:$0xff] %v25
    // Predicated region
    $region10: #{tpu_custom_call.1} parent=1 // pred_check
      _
    $region11: #{tpu_custom_call.1} parent=1 // pred_check_branch
      %29 = sbr.rel (0) target = $region13
    $region12: #{tpu_custom_call.1} parent=1 // pred_region
      _
    $region13: #{tpu_custom_call.1} parent=1 // pred_fallthru
      _
    // Predicated region
    $region14: #{tpu_custom_call.1} parent=1 // pred_check
      _
    $region15: #{tpu_custom_call.1} parent=1 // pred_check_branch
      %31 = sbr.rel (0) target = $region17
    $region16: #{tpu_custom_call.1} parent=1 // pred_region
      _
    $region17: #{tpu_custom_call.1} parent=1 // pred_fallthru
      _
    %32 = vsyncpa [#allocation3], 1

</llo_original>
